<compile_context>
chip_gen: v7x
topology: tpu7x:2x2x1
jax: 0.10.0
libtpu: 0.0.40
codegen_flags: <defaults>
</compile_context>

<pallas_src>
import functools

import jax
import jax.numpy as jnp
from jax.experimental import pallas as pl
from jax.experimental.pallas import tpu as pltpu

LANES = 128
SUBLANES = 8
MAX_BLOCK_ROWS = 4096   # sweepable; 4096 x 128 x 4B = 2 MiB per input tile (f32)
NUM_CORE_SPLITS = 2     # v7x has 2 TensorCores; extra axis is ~free on v5e/v6e


def _rmsle_kernel(pred_ref, true_ref, out_ref, *, rows_total, block_rows,
                  blocks_per_core, needs_mask):
    c = pl.program_id(0)   # core-split ("parallel") axis
    i = pl.program_id(1)   # streaming ("arbitrary") axis

    @pl.when(i == 0)
    def _():
        out_ref[...] = jnp.zeros_like(out_ref)

    # Cast on load (HBM streaming stays in the caller's dtype; VPU has slack).
    p = jnp.maximum(pred_ref[...].astype(jnp.float32), 0.0)   # clamp(min=0)
    t = true_ref[...].astype(jnp.float32)
    # TODO(synk): if a v7x bundle dump shows the EUP slot binding, switch to the
    # single-log form log1p((p - t) / (1 + t)) with an *exact* divide (the exact
    # divide itself costs an EUP reciprocal, so the win is marginal; approx
    # reciprocal would break the 1e-5 tolerance).
    d = jnp.log1p(p) - jnp.log1p(t)
    sq = d * d

    def accumulate(vals):
        if block_rows % SUBLANES == 0:
            # Layout-preserving fold (block_rows,128)->(8,128): the reshape splits
            # the sublane-major axis (no VMEM copy) and the axis-0 sum is pure
            # vreg adds; the expensive XLU reduce happens once, in the wrapper.
            out_ref[...] += vals.reshape(
                block_rows // SUBLANES, SUBLANES, LANES).sum(axis=0)
        else:
            # Only reachable when the whole problem is a single small, sublane-
            # unaligned block (block_rows == rows); a one-off XLU reduce is fine.
            out_ref[0:1, :] += vals.sum(axis=0, keepdims=True)

    if needs_mask:
        gb = c * blocks_per_core + i          # global (unclamped) block index
        overrun = (gb + 1) * block_rows > rows_total

        @pl.when(jnp.logical_not(overrun))
        def _():
            accumulate(sq)

        @pl.when(overrun)
        def _():
            # Rows past rows_total come from the DMA-overrun tail of the last
            # valid block or from a duplicated (clamped) trailing block; zero
            # their *squared difference* so undefined data (even NaN) cannot
            # leak into the sum.
            row_ids = (jax.lax.broadcasted_iota(jnp.int32, (block_rows, LANES), 0)
                       + gb * block_rows)
            accumulate(jnp.where(row_ids < rows_total, sq, 0.0))
    else:
        accumulate(sq)


def rmsle_loss(y_pred, y_true):
    assert y_pred.shape == y_true.shape
    n = y_pred.size

    # Flatten in native dtype -- no astype copy in the wrapper.
    pred_flat = jnp.ravel(y_pred)
    true_flat = jnp.ravel(y_true)

    # Lane alignment only (128). Zero lane-padding on both operands contributes
    # exactly 0 to the sum (log1p(0)-log1p(0)=0); the mean divides by n.
    pad = (-n) % LANES
    if pad:
        # TODO(synk): mask the <128-element tail in-kernel to remove this copy
        # entirely for the (rare) lane-unaligned case.
        pred_flat = jnp.pad(pred_flat, (0, pad))
        true_flat = jnp.pad(true_flat, (0, pad))
    rows = (n + pad) // LANES
    pred2d = pred_flat.reshape(rows, LANES)
    true2d = true_flat.reshape(rows, LANES)

    # block_rows is either the full row count (small inputs) or a multiple of 8,
    # satisfying the (8,128) block-shape rule in both cases.
    block_rows = min(rows, MAX_BLOCK_ROWS)
    num_blocks = pl.cdiv(rows, block_rows)

    ncores = NUM_CORE_SPLITS if num_blocks >= NUM_CORE_SPLITS else 1
    blocks_per_core = pl.cdiv(num_blocks, ncores)
    total_grid_blocks = ncores * blocks_per_core
    # Mask needed if the last valid block is ragged, or the 2-way split created
    # duplicate (fully masked) trailing blocks on the last core.
    needs_mask = (rows % block_rows != 0) or (total_grid_blocks != num_blocks)

    if total_grid_blocks == num_blocks:
        in_map = lambda c, i: (c * blocks_per_core + i, 0)
    else:
        # Clamp so the duplicate trailing block's DMA stays in bounds; its
        # contribution is zeroed by the in-kernel mask (which uses the
        # unclamped global block index).
        in_map = lambda c, i: (jnp.minimum(c * blocks_per_core + i, num_blocks - 1), 0)

    kernel = functools.partial(
        _rmsle_kernel,
        rows_total=rows,
        block_rows=block_rows,
        blocks_per_core=blocks_per_core,
        needs_mask=needs_mask,
    )

    # TODO(synk): optionally sweep pipeline_mode=pl.Buffered(3) on the input
    # BlockSpecs if xprof on v7x still shows DMA gaps between steps.
    partials = pl.pallas_call(
        kernel,
        out_shape=jax.ShapeDtypeStruct((ncores, SUBLANES, LANES), jnp.float32),
        grid_spec=pltpu.PrefetchScalarGridSpec(
            num_scalar_prefetch=0,
            grid=(ncores, blocks_per_core),
            in_specs=[
                pl.BlockSpec((block_rows, LANES), in_map),
                pl.BlockSpec((block_rows, LANES), in_map),
            ],
            out_specs=pl.BlockSpec((None, SUBLANES, LANES), lambda c, i: (c, 0, 0)),
        ),
        compiler_params=pltpu.CompilerParams(
            dimension_semantics=("parallel", "arbitrary"),
            vmem_limit_bytes=32 * 1024 * 1024,
        ),
    )(pred2d, true2d)

    # Trivial per-core / (8,128) combine + sqrt(mean) outside the kernel.
    # Note: for very large n the f32 partial accumulators can drift ~1e-4
    # relative; acceptable for the stated 1e-5/1e-6 tolerance at test sizes.
    return jnp.sqrt(jnp.sum(partials) / n)


def rmsle_ref(y_pred, y_true):
    p = jnp.maximum(y_pred.astype(jnp.float32), 0.0)
    d = jnp.log1p(p) - jnp.log1p(y_true.astype(jnp.float32))
    return jnp.sqrt(jnp.mean(d * d))


if __name__ == "__main__":
    key = jax.random.PRNGKey(0)
    k1, k2 = jax.random.split(key)
    shape = (2, 4, 16, 16)  # NCHW-like small example
    # y_pred may be negative (clamped in the loss); y_true must be > -1 for log1p
    # (standard RMSLE assumption, same as the PyTorch reference).
    y_pred = jax.random.normal(k1, shape, dtype=jnp.float32)
    y_true = jax.random.uniform(k2, shape, dtype=jnp.float32, minval=0.0, maxval=5.0)

    loss = jax.block_until_ready(rmsle_loss(y_pred, y_true))
    ref = jax.block_until_ready(rmsle_ref(y_pred, y_true))

    assert jnp.allclose(loss, ref, rtol=1e-5, atol=1e-6), (loss, ref)
    print("KERNEL_OK")
</pallas_src>

<mosaic_0001>
module attributes {stable_mosaic.version = 11 : i64} {
  func.func @_rmsle_kernel(%arg0: i32, %arg1: i32, %arg2: memref<16x128xf32, #tpu.memory_space<vmem>>, %arg3: memref<16x128xf32, #tpu.memory_space<vmem>>, %arg4: memref<1x8x128xf32, #tpu.memory_space<vmem>>) attributes {dimension_semantics = [#tpu.dimension_semantics<parallel>, #tpu.dimension_semantics<arbitrary>], iteration_bounds = array<i64: 1, 1>, scalar_prefetch = 0 : i64, scratch_operands = 0 : i64, tpu.core_type = #tpu.core_type<tc>, window_params = [{transform_indices = @transform_0, window_bounds = array<i64: 16, 128>}, {transform_indices = @transform_1, window_bounds = array<i64: 16, 128>}, {transform_indices = @transform_2, window_bounds = array<i64: 1, 8, 128>}]} {
    %c0_i32 = arith.constant 0 : i32
    %0 = arith.cmpi eq, %arg1, %c0_i32 : i32
    %1 = arith.extui %0 : i1 to i32
    %c0_i32_0 = arith.constant 0 : i32
    %2 = arith.cmpi ne, %1, %c0_i32_0 : i32
    scf.if %2 {
      %cst_11 = arith.constant 0.000000e+00 : f32
      %19 = vector.broadcast %cst_11 : f32 to vector<8x128xf32>
      %c0_12 = arith.constant 0 : index
      %c0_13 = arith.constant 0 : index
      %c0_14 = arith.constant 0 : index
      %20 = vector.load %arg4[%c0_12, %c0_13, %c0_14] : memref<1x8x128xf32, #tpu.memory_space<vmem>>, vector<1x8x128xf32>
      %21 = vector.shape_cast %20 : vector<1x8x128xf32> to vector<8x128xf32>
      %22 = vector.shape_cast %19 : vector<8x128xf32> to vector<1x8x128xf32>
      tpu.vector_store %arg4[%c0_12, %c0_13, %c0_14], %22 {strides = array<i32>} : memref<1x8x128xf32, #tpu.memory_space<vmem>>, vector<1x8x128xf32>,
    } else {
    }
    %c0 = arith.constant 0 : index
    %c0_1 = arith.constant 0 : index
    %3 = vector.load %arg2[%c0, %c0_1] : memref<16x128xf32, #tpu.memory_space<vmem>>, vector<16x128xf32>
    %cst = arith.constant 0.000000e+00 : f32
    %4 = vector.broadcast %cst : f32 to vector<16x128xf32>
    %5 = arith.maximumf %3, %4 : vector<16x128xf32>
    %c0_2 = arith.constant 0 : index
    %c0_3 = arith.constant 0 : index
    %6 = vector.load %arg3[%c0_2, %c0_3] : memref<16x128xf32, #tpu.memory_space<vmem>>, vector<16x128xf32>
    %7 = math.log1p %5 : vector<16x128xf32>
    %8 = math.log1p %6 : vector<16x128xf32>
    %9 = arith.subf %7, %8 : vector<16x128xf32>
    %10 = arith.mulf %9, %9 : vector<16x128xf32>
    %c0_4 = arith.constant 0 : index
    %c0_5 = arith.constant 0 : index
    %c0_6 = arith.constant 0 : index
    %11 = vector.load %arg4[%c0_4, %c0_5, %c0_6] : memref<1x8x128xf32, #tpu.memory_space<vmem>>, vector<1x8x128xf32>
    %12 = vector.shape_cast %11 : vector<1x8x128xf32> to vector<8x128xf32>
    %13 = vector.shape_cast %10 : vector<16x128xf32> to vector<2x8x128xf32>
    %cst_7 = arith.constant dense<0.000000e+00> : vector<8x128xf32>
    %14 = vector.multi_reduction <add>, %13, %cst_7 [0] : vector<2x8x128xf32> to vector<8x128xf32>
    %15 = arith.addf %12, %14 : vector<8x128xf32>
    %c0_8 = arith.constant 0 : index
    %c0_9 = arith.constant 0 : index
    %c0_10 = arith.constant 0 : index
    %16 = vector.load %arg4[%c0_8, %c0_9, %c0_10] : memref<1x8x128xf32, #tpu.memory_space<vmem>>, vector<1x8x128xf32>
    %17 = vector.shape_cast %16 : vector<1x8x128xf32> to vector<8x128xf32>
    %18 = vector.shape_cast %15 : vector<8x128xf32> to vector<1x8x128xf32>
    tpu.vector_store %arg4[%c0_8, %c0_9, %c0_10], %18 {strides = array<i32>} : memref<1x8x128xf32, #tpu.memory_space<vmem>>, vector<1x8x128xf32>,
    return
  }
  func.func @transform_0(%arg0: i32, %arg1: i32) -> (i32, i32) {
    %c1_i32 = arith.constant 1 : i32
    %0 = arith.muli %arg0, %c1_i32 : i32
    %1 = arith.addi %0, %arg1 : i32
    %c0_i32 = arith.constant 0 : i32
    %c0_i32_0 = arith.constant 0 : i32
    return %1, %c0_i32 : i32, i32
  }
  func.func @transform_1(%arg0: i32, %arg1: i32) -> (i32, i32) {
    %c1_i32 = arith.constant 1 : i32
    %0 = arith.muli %arg0, %c1_i32 : i32
    %1 = arith.addi %0, %arg1 : i32
    %c0_i32 = arith.constant 0 : i32
    %c0_i32_0 = arith.constant 0 : i32
    return %1, %c0_i32 : i32, i32
  }
  func.func @transform_2(%arg0: i32, %arg1: i32) -> (i32, i32, i32) {
    %c0_i32 = arith.constant 0 : i32
    %c0_i32_0 = arith.constant 0 : i32
    %c0_i32_1 = arith.constant 0 : i32
    return %arg0, %c0_i32, %c0_i32_0 : i32, i32, i32
  }
}

</mosaic_0001>

<llo_original>
// kernel: tpu_custom_call.1
$region0: #{tpu_custom_call.1}
  #allocation0 [shape = 'u32[]', space=smem, size = 0x4, offset = 0x4, fixed_abs, tag = 'smem constant byte address 0x4 - core index']
  #allocation1 [shape = 'u32[144,128]{1,0:T(1,128)}', space=vmem, size = 0x12000, scoped, tag = 'internal scratch']
  %s0 = inlined_call_operand.hbm [shape: f32[16,128], index: 0, kind: input, shape index: {}]
  %s1 = inlined_call_operand.hbm [shape: f32[16,128], index: 1, kind: input, shape index: {}]
  %s2 = inlined_call_operand.hbm [shape: f32[1,8,128], index: 2, kind: output, shape index: {}]
  %s3 = sld [smem:[#allocation0]]
  $region30: #{tpu_custom_call.1} parent=0
    _
  %s5 = ssub.s32 1, %s3
  %s6 = scalar_select 0, %s5, %s3
  $region1: #{tpu_custom_call.1} parent=0
    #allocation2 [shape = 'u8[8192]{0}', space=vmem, size = 0x2000, scoped, tag = 'input window, operand 0, single buffered']
    #allocation3 [shape = 's32[1]{0}', space=sflag, size = 0x4, scoped, tag = 'scoped memory for tpu_custom_call.1']
    #allocation4 [shape = 's32[1]{0}', space=sflag, size = 0x4, scoped, tag = 'scoped memory for tpu_custom_call.1']
    #allocation5 [shape = 'u8[8192]{0}', space=vmem, size = 0x2000, scoped, tag = 'input window, operand 1, single buffered']
    #allocation6 [shape = 's32[1]{0}', space=sflag, size = 0x4, scoped, tag = 'scoped memory for tpu_custom_call.1']
    #allocation7 [shape = 'u8[4096]{0}', space=vmem, size = 0x1000, scoped, tag = 'output window, operand 0, single buffered']
    %7 = vsyncpa [#allocation3], 0
    %8 = vsyncpa [#allocation6], 0
    %9 = vsyncpa [#allocation4], 0
    // Predicated region
    $region2: #{tpu_custom_call.1} parent=1 // pred_check
      _
    $region3: #{tpu_custom_call.1} parent=1 // pred_check_branch
      %11 = sbr.rel (0) target = $region5
    $region4: #{tpu_custom_call.1} parent=1 // pred_region
      %s12 = sadd.s32 0, 0
      %s13 = smul.u32 2, %s12
      %s15 = ssub.s32 256, 256
      %16 = vsyncadd [#allocation3], %s15
      %s17 = smul.addr %s13, 128
      %s18 = scalar_lea.hbm %s0, %s17
      %s19 = sshll.u32 [#allocation2], 4
      %s20 = int_to_ptr.vmem [resolvable:$true] %s19
      %25 = dma.hbm_to_vmem [thread:$0]  %s18, 256, %s20, [#allocation3], 128, 128, 8
    $region5: #{tpu_custom_call.1} parent=1 // pred_fallthru
      _
    // Predicated region
    $region6: #{tpu_custom_call.1} parent=1 // pred_check
      _
    $region7: #{tpu_custom_call.1} parent=1 // pred_check_branch
      %27 = sbr.rel (0) target = $region9
    $region8: #{tpu_custom_call.1} parent=1 // pred_region
      %s28 = sadd.s32 0, 0
      %s29 = smul.u32 2, %s28
      %s31 = ssub.s32 256, 256
      %32 = vsyncadd [#allocation6], %s31
      %s33 = smul.addr %s29, 128
      %s34 = scalar_lea.hbm %s1, %s33
      %s35 = sshll.u32 [#allocation5], 4
      %s36 = int_to_ptr.vmem [resolvable:$true] %s35
      %41 = dma.hbm_to_vmem [thread:$0]  %s34, 256, %s36, [#allocation6], 128, 128, 8
    $region9: #{tpu_custom_call.1} parent=1 // pred_fallthru
      _
    // Predicated region
    $region10: #{tpu_custom_call.1} parent=1 // pred_check
      _
    $region11: #{tpu_custom_call.1} parent=1 // pred_check_branch
      %43 = sbr.rel (0) target = $region13
    $region12: #{tpu_custom_call.1} parent=1 // pred_region
      %44 = dma.done [#allocation3], 256
    $region13: #{tpu_custom_call.1} parent=1 // pred_fallthru
      _
    // Predicated region
    $region14: #{tpu_custom_call.1} parent=1 // pred_check
      _
    $region15: #{tpu_custom_call.1} parent=1 // pred_check_branch
      %46 = sbr.rel (0) target = $region17
    $region16: #{tpu_custom_call.1} parent=1 // pred_region
      %47 = dma.done [#allocation6], 256
    $region17: #{tpu_custom_call.1} parent=1 // pred_fallthru
      _
    %s48 = sadd.s32 0, 0
    %s49 = smul.u32 2, %s48
    %s50 = sadd.s32 0, 0
    %s51 = smul.u32 2, %s50
    %p52 = scmp.eq.s32.totalorder 0, 0
    // Predicated region
    $region18: #{tpu_custom_call.1} parent=1 // pred_check
      %p53 = pneg %p52
    $region19: #{tpu_custom_call.1} parent=1 // pred_check_branch
      %55 = sbr.rel (%p53) target = $region21
    $region20: #{tpu_custom_call.1} parent=1 // pred_region
      %56 = vst [vmem:[#allocation7] sm:$0xff] 0.0
    $region21: #{tpu_custom_call.1} parent=1 // pred_fallthru
      _
    %v57 = vld [vmem:[#allocation2] sm:$0xff]
    %v58 = vld [vmem:[#allocation2 + $0x8] sm:$0xff]
    %v59 = vmax.f32 %v57, 0.0
    %v60 = vmax.f32 %v58, 0.0
    %v61 = vld [vmem:[#allocation5] sm:$0xff]
    %v62 = vld [vmem:[#allocation5 + $0x8] sm:$0xff]
    %v63 = vadd.f32 %v59, 1.0
    %v64 = vlog2.pop %v63
    %v65 = vmul.f32 %v64, 0.6931472
    %v66 = vmul.f32 -0.5, %v59
    %v67 = vadd.f32 %v66, 1.0
    %v68 = vmul.f32 %v67, %v59
    %v69 = vand.u32 2147483647, %v59
    %vm70 = vcmp.lt.f32.partialorder %v69, 0.0004427343
    %v71 = vsel %vm70, %v68, %v65
    %v72 = vadd.f32 %v60, 1.0
    %v73 = vlog2.pop %v72
    %v74 = vmul.f32 %v73, 0.6931472
    %v75 = vmul.f32 -0.5, %v60
    %v76 = vadd.f32 %v75, 1.0
    %v77 = vmul.f32 %v76, %v60
    %v78 = vand.u32 2147483647, %v60
    %vm79 = vcmp.lt.f32.partialorder %v78, 0.0004427343
    %v80 = vsel %vm79, %v77, %v74
    %v81 = vadd.f32 %v61, 1.0
    %v82 = vlog2.pop %v81
    %v83 = vmul.f32 %v82, 0.6931472
    %v84 = vmul.f32 -0.5, %v61
    %v85 = vadd.f32 %v84, 1.0
    %v86 = vmul.f32 %v85, %v61
    %v87 = vand.u32 2147483647, %v61
    %vm88 = vcmp.lt.f32.partialorder %v87, 0.0004427343
    %v89 = vsel %vm88, %v86, %v83
    %v90 = vadd.f32 %v62, 1.0
    %v91 = vlog2.pop %v90
    %v92 = vmul.f32 %v91, 0.6931472
    %v93 = vmul.f32 -0.5, %v62
    %v94 = vadd.f32 %v93, 1.0
    %v95 = vmul.f32 %v94, %v62
    %v96 = vand.u32 2147483647, %v62
    %vm97 = vcmp.lt.f32.partialorder %v96, 0.0004427343
    %v98 = vsel %vm97, %v95, %v92
    %v99 = vsub.f32 %v71, %v89
    %v100 = vsub.f32 %v80, %v98
    %v101 = vmul.f32 %v99, %v99
    %v102 = vmul.f32 %v100, %v100
    %v103 = vld [vmem:[#allocation7] sm:$0xff]
    %v104 = vadd.f32 %v101, %v102
    %v105 = vadd.f32 %v103, %v104
    %106 = vst [vmem:[#allocation7] sm:$0xff] %v105
    // Predicated region
    $region22: #{tpu_custom_call.1} parent=1 // pred_check
      _
    $region23: #{tpu_custom_call.1} parent=1 // pred_check_branch
      %108 = sbr.rel (0) target = $region25
    $region24: #{tpu_custom_call.1} parent=1 // pred_region
      %s110 = ssub.s32 128, 128
      %111 = vsyncadd [#allocation4], %s110
      %s113 = sshll.u32 [#allocation7], 4
      %s114 = int_to_ptr.vmem [resolvable:$true] %s113
      %116 = dma.vmem_to_hbm [thread:$0]  %s114, 128, %s2, [#allocation4]
    $region25: #{tpu_custom_call.1} parent=1 // pred_fallthru
      _
    // Predicated region
    $region26: #{tpu_custom_call.1} parent=1 // pred_check
      _
    $region27: #{tpu_custom_call.1} parent=1 // pred_check_branch
      %118 = sbr.rel (0) target = $region29
    $region28: #{tpu_custom_call.1} parent=1 // pred_region
      %119 = dma.done [#allocation4], 128
    $region29: #{tpu_custom_call.1} parent=1 // pred_fallthru
      _
    %120 = vsyncpa [#allocation3], 1
    %121 = vsyncpa [#allocation6], 1
    %122 = vsyncpa [#allocation4], 1

</llo_original>
